<compile_context>
chip_gen: v6e
topology: v6e:2x2x1
jax: 0.10.0
libtpu: 0.0.40
codegen_flags: <defaults>
</compile_context>

<pallas_src>
import jax
import jax.numpy as jnp
from jax.experimental import pallas as pl
from jax.experimental.pallas import tpu as pltpu

_LANES = 128
_TARGET_BLOCK_BYTES = 4 * 1024 * 1024      # ~4 MiB per block
_VMEM_LIMIT_BYTES = 32 * 1024 * 1024       # explicit scoped-VMEM limit (v5e-safe)


def _soft_modulus_q_kernel(x_ref, o_ref):
    x = x_ref[...].astype(jnp.float32)
    ax = jnp.abs(x)
    y = jnp.where(ax <= 1.0, x * x * (2.0 - ax), ax)
    o_ref[...] = y.astype(o_ref.dtype)


def _soft_modulus_q_jnp(x):
    # Tail / tiny-input path (plain XLA), matching the kernel's f32 compute.
    xf = x.astype(jnp.float32)
    ax = jnp.abs(xf)
    return jnp.where(ax <= 1.0, xf * xf * (2.0 - ax), ax).astype(x.dtype)


def _ceil_div(a, b):
    return -(-a // b)


def _round_up(a, m):
    return _ceil_div(a, m) * m


def _sublane_multiple(itemsize):
    # Sub-32-bit dtypes pack rows along sublanes: f32/int32 -> 8, bf16 -> 16,
    # int8/fp8 -> 32.  Block shapes respect the packed tile height.
    return max(8, 32 // int(itemsize))


def _choose_block_rows(rows, sub, lanes, itemsize):
    """Pick a block row count: MiB-scale, sublane-aligned, even grid steps."""
    if rows <= sub:
        return rows  # block == full first dim (allowed even if < sublane mult)

    tr = min(rows, max(sub, _TARGET_BLOCK_BYTES // (lanes * itemsize)))
    tr = max(sub, (tr // sub) * sub)

    if rows < 2 * sub:
        return tr

    steps = _ceil_div(rows, tr)
    if steps == 1:
        # Split into (at least) 2 steps so v7x can shard across both TCs.
        tr = min(tr, max(sub, _round_up(_ceil_div(rows, 2), sub)))
    elif steps % 2 == 1 and steps <= 16:
        # Small odd step count leaves one v7x TC under-loaded; prefer even.
        cand = max(sub, _round_up(_ceil_div(rows, steps + 1), sub))
        if _ceil_div(rows, cand) % 2 == 0:
            tr = cand
    return tr


def _run_2d(x2d):
    rows, lanes = x2d.shape
    itemsize = int(jnp.dtype(x2d.dtype).itemsize)
    sub = _sublane_multiple(itemsize)
    tr = _choose_block_rows(rows, sub, lanes, itemsize)
    grid = (pl.cdiv(rows, tr),)  # ragged last row-block is masked by Pallas

    n = rows * lanes
    cost = pl.CostEstimate(
        flops=6 * n,
        transcendentals=0,
        bytes_accessed=2 * n * itemsize,
    )

    return pl.pallas_call(
        _soft_modulus_q_kernel,
        out_shape=jax.ShapeDtypeStruct((rows, lanes), x2d.dtype),
        grid_spec=pltpu.PrefetchScalarGridSpec(
            num_scalar_prefetch=0,
            grid=grid,
            in_specs=[pl.BlockSpec((tr, lanes), lambda i: (i, 0))],
            out_specs=pl.BlockSpec((tr, lanes), lambda i: (i, 0)),
        ),
        compiler_params=pltpu.CompilerParams(
            dimension_semantics=("parallel",),
            vmem_limit_bytes=_VMEM_LIMIT_BYTES,
        ),
        cost_estimate=cost,
    )(x2d)


def soft_modulus_q(x):
    """Apply SoftModulusQ elementwise to an arbitrary-shaped array via Pallas."""
    orig_shape = x.shape
    n = x.size
    if n == 0:
        return x

    x_flat = x.reshape(-1)
    n_bulk = (n // _LANES) * _LANES

    if n_bulk == n:
        # Fast path: metadata-only reshape to a lane-dense slab.
        out2d = _run_2d(x_flat.reshape(n // _LANES, _LANES))
        return out2d.reshape(orig_shape)

    if n_bulk == 0:
        # Tiny input (< 128 elements): a kernel launch isn't worth it.
        return _soft_modulus_q_jnp(x)

    # Unaligned: run the 128-aligned bulk through the kernel, handle the tiny
    # (<128 element) tail with plain jnp ops.  No whole-array pad/slice.
    # TODO(synk): the final concatenate is still one extra pass over the output;
    # folding the tail into the kernel as a padded mini-block would remove it.
    bulk = x_flat[:n_bulk].reshape(n_bulk // _LANES, _LANES)
    tail = x_flat[n_bulk:]
    out_bulk = _run_2d(bulk).reshape(-1)
    out_tail = _soft_modulus_q_jnp(tail)
    return jnp.concatenate([out_bulk, out_tail]).reshape(orig_shape)


def soft_modulus_q_ref(x):
    ax = jnp.abs(x)
    return jnp.where(ax <= 1, x * x * (2 - ax), ax)


if __name__ == "__main__":
    root = jax.random.PRNGKey(0)
    k0, k1, k2, k3 = jax.random.split(root, 4)

    # Small NCHW-like input consistent with a conv-activation use case.
    # 2*4*16*16 = 2048 elements -> 128-aligned fast path (2 grid steps).
    x = jax.random.normal(k0, (2, 4, 16, 16), dtype=jnp.float32) * 2.0
    y = soft_modulus_q(x)
    jax.block_until_ready(y)
    y_ref = soft_modulus_q_ref(x)
    assert y.shape == x.shape and y.dtype == x.dtype
    assert jnp.allclose(y, y_ref, atol=1e-6, rtol=1e-6)

    # Unaligned split path: 5*67 = 335 elements -> 256-element bulk + 79 tail.
    x2 = jax.random.normal(k1, (5, 67), dtype=jnp.float32) * 2.0
    y2 = soft_modulus_q(x2)
    jax.block_until_ready(y2)
    assert y2.shape == x2.shape and y2.dtype == x2.dtype
    assert jnp.allclose(y2, soft_modulus_q_ref(x2), atol=1e-6, rtol=1e-6)

    # Tiny path: 3*5*7 = 105 elements (< 128).
    x3 = jax.random.normal(k2, (3, 5, 7), dtype=jnp.float32) * 2.0
    y3 = soft_modulus_q(x3)
    jax.block_until_ready(y3)
    assert jnp.allclose(y3, soft_modulus_q_ref(x3), atol=1e-6, rtol=1e-6)

    # bf16 fast path (sub-32-bit packing; compute upcast to f32 in-kernel).
    x4 = (jax.random.normal(k3, (4, 8, 64), dtype=jnp.float32) * 2.0).astype(jnp.bfloat16)
    y4 = soft_modulus_q(x4)
    jax.block_until_ready(y4)
    assert y4.shape == x4.shape and y4.dtype == x4.dtype
    assert jnp.allclose(y4.astype(jnp.float32),
                        soft_modulus_q_ref(x4.astype(jnp.float32)),
                        atol=2e-2, rtol=2e-2)

    print("KERNEL_OK")
</pallas_src>

<mosaic_0001>
module attributes {stable_mosaic.version = 11 : i64} {
  func.func @_soft_modulus_q_kernel(%arg0: i32, %arg1: memref<8x128xf32, #tpu.memory_space<vmem>>, %arg2: memref<8x128xf32, #tpu.memory_space<vmem>>) attributes {dimension_semantics = [#tpu.dimension_semantics<parallel>], iteration_bounds = array<i64: 2>, scalar_prefetch = 0 : i64, scratch_operands = 0 : i64, tpu.core_type = #tpu.core_type<tc>, window_params = [{transform_indices = @transform_0, window_bounds = array<i64: 8, 128>}, {transform_indices = @transform_1, window_bounds = array<i64: 8, 128>}]} {
    %c0 = arith.constant 0 : index
    %c0_0 = arith.constant 0 : index
    %0 = vector.load %arg1[%c0, %c0_0] : memref<8x128xf32, #tpu.memory_space<vmem>>, vector<8x128xf32>
    %1 = math.absf %0 : vector<8x128xf32>
    %cst = arith.constant 1.000000e+00 : f32
    %2 = vector.broadcast %cst : f32 to vector<8x128xf32>
    %3 = arith.cmpf ole, %1, %2 : vector<8x128xf32>
    %4 = arith.mulf %0, %0 : vector<8x128xf32>
    %cst_1 = arith.constant 2.000000e+00 : f32
    %5 = vector.broadcast %cst_1 : f32 to vector<8x128xf32>
    %6 = arith.subf %5, %1 : vector<8x128xf32>
    %7 = arith.mulf %4, %6 : vector<8x128xf32>
    %8 = arith.select %3, %7, %1 : vector<8x128xi1>, vector<8x128xf32>
    %c0_2 = arith.constant 0 : index
    %c0_3 = arith.constant 0 : index
    %9 = vector.load %arg2[%c0_2, %c0_3] : memref<8x128xf32, #tpu.memory_space<vmem>>, vector<8x128xf32>
    tpu.vector_store %arg2[%c0_2, %c0_3], %8 {strides = array<i32>} : memref<8x128xf32, #tpu.memory_space<vmem>>, vector<8x128xf32>,
    return
  }
  func.func @transform_0(%arg0: i32) -> (i32, i32) {
    %c0_i32 = arith.constant 0 : i32
    %c0_i32_0 = arith.constant 0 : i32
    return %arg0, %c0_i32 : i32, i32
  }
  func.func @transform_1(%arg0: i32) -> (i32, i32) {
    %c0_i32 = arith.constant 0 : i32
    %c0_i32_0 = arith.constant 0 : i32
    return %arg0, %c0_i32 : i32, i32
  }
}

</mosaic_0001>

<llo_original>
// kernel: tpu_custom_call.1
$region0: #{tpu_custom_call.1}
  #allocation0 [shape = 'u32[]', space=smem, size = 0x4, offset = 0x4, fixed_abs, tag = 'smem constant byte address 0x4 - core index']
  #allocation1 [shape = 'u32[144,128]{1,0:T(1,128)}', space=vmem, size = 0x12000, scoped, tag = 'internal scratch']
  %s0 = inlined_call_operand.hbm [shape: f32[16,128], index: 0, kind: input, shape index: {}]
  %s1 = inlined_call_operand.hbm [shape: f32[16,128], index: 1, kind: output, shape index: {}]
  %s2 = sld [smem:[#allocation0]]
  $region41: #{tpu_custom_call.1} parent=0
    _
  %s4 = ssub.s32 1, %s2
  %s5 = scalar_select 0, %s4, %s2
  $region1: #{tpu_custom_call.1} parent=0
    #allocation2 [shape = 'u8[8192]{0}', space=vmem, size = 0x2000, scoped, tag = 'input window, operand 0']
    #allocation3 [shape = 's32[2]{0}', space=sflag, size = 0x8, scoped, tag = 'scoped memory for tpu_custom_call.1']
    #allocation4 [shape = 's32[2]{0}', space=sflag, size = 0x8, scoped, tag = 'scoped memory for tpu_custom_call.1']
    #allocation5 [shape = 'u8[8192]{0}', space=vmem, size = 0x2000, scoped, tag = 'output window, operand 0']
    %6 = vsyncpa [#allocation3], 0
    %s7 = scalar_lea.sflag [#allocation3], 1
    %8 = vsyncpa %s7, 0
    %9 = vsyncpa [#allocation4], 0
    %s10 = scalar_lea.sflag [#allocation4], 1
    %11 = vsyncpa %s10, 0
    loop: start=0, step=1, limit=4
    $region2: #{tpu_custom_call.1} parent=1 // loop_pre_header
      _
    $region3: #{tpu_custom_call.1} parent=1 // loop_header
      %s13 = sphi 0, %s17
      %p14 = scmp.ge.s32.totalorder %s13, 4
      %s23 = sphi 0, %s25
      %s26 = sphi 0, %s23
      %s27 = sphi 0, %s26
      %s43 = sphi 0, %s27
      %s49 = sphi 0, %s51
      %s52 = sphi 0, %s49
      %s53 = sphi 0, %s52
      %s69 = sphi 0, %s53
    $region4: #{tpu_custom_call.1} parent=1 // loop_header_branch
      %16 = sbr.rel (%p14) target = $region8
    $region5: #{tpu_custom_call.1} parent=1 // loop_body
      %s18 = ssub.s32 %s13, 1
      %s19 = ssub.s32 %s13, 2
      %s20 = sadd.s32 %s13, 1
      %s21 = ssub.s32 %s13, %s20
      %p22 = scmp.eq.s32.totalorder %s21, 0
      %s24 = sadd.s32 %s23, 1
      %s25 = scalar_select %p22, %s23, %s24
      %p28 = pneg %p22
      %p29 = scmp.eq.s32.totalorder %s13, 1
      %p30 = por %p28, %p29
      %p31 = scmp.ne.s32.totalorder %s23, %s26
      %p32 = scmp.eq.s32.totalorder %s13, 0
      %p33 = por %p31, %p32
      %p34 = scmp.ne.s32.totalorder %s23, %s26
      %p35 = scmp.eq.s32.totalorder %s18, 1
      %p36 = por %p34, %p35
      %p37 = scmp.ne.s32.totalorder %s26, %s27
      %p38 = scmp.eq.s32.totalorder %s18, 0
      %p39 = por %p37, %p38
      %p40 = scmp.ne.s32.totalorder %s26, %s27
      %p41 = scmp.eq.s32.totalorder %s19, 1
      %p42 = por %p40, %p41
      %p44 = scmp.ne.s32.totalorder %s27, %s43
      %p45 = scmp.eq.s32.totalorder %s19, 0
      %p46 = por %p44, %p45
      %s47 = ssub.s32 %s13, %s20
      %p48 = scmp.eq.s32.totalorder %s47, 0
      %s50 = sadd.s32 %s49, 1
      %s51 = scalar_select %p48, %s49, %s50
      %p54 = pneg %p48
      %p55 = scmp.eq.s32.totalorder %s13, 1
      %p56 = por %p54, %p55
      %p57 = scmp.ne.s32.totalorder %s49, %s52
      %p58 = scmp.eq.s32.totalorder %s13, 0
      %p59 = por %p57, %p58
      %p60 = scmp.ne.s32.totalorder %s49, %s52
      %p61 = scmp.eq.s32.totalorder %s18, 1
      %p62 = por %p60, %p61
      %p63 = scmp.ne.s32.totalorder %s52, %s53
      %p64 = scmp.eq.s32.totalorder %s18, 0
      %p65 = por %p63, %p64
      %p66 = scmp.ne.s32.totalorder %s52, %s53
      %p67 = scmp.eq.s32.totalorder %s19, 1
      %p68 = por %p66, %p67
      %p70 = scmp.ne.s32.totalorder %s53, %s69
      %p71 = scmp.eq.s32.totalorder %s19, 0
      %p72 = por %p70, %p71
      %p73 = scmp.le.s32.totalorder 1, %s13
      %p74 = scmp.lt.s32.totalorder %s13, 3
      %p75 = pnand %p73, %p74
      %p76 = pneg %p75
      // Predicated region
      $region9: #{tpu_custom_call.1} parent=5 // pred_check
        _
      $region10: #{tpu_custom_call.1} parent=5 // pred_check_branch
        %78 = sbr.rel (%p75) target = $region12
      $region11: #{tpu_custom_call.1} parent=5 // pred_region
        %s79 = ssub.s32 %s13, 1
      $region12: #{tpu_custom_call.1} parent=5 // pred_fallthru
        _
      %p80 = scmp.lt.s32.totalorder %s13, 2
      // Predicated region
      $region13: #{tpu_custom_call.1} parent=5 // pred_check
        %p81 = pneg %p80
      $region14: #{tpu_custom_call.1} parent=5 // pred_check_branch
        %83 = sbr.rel (%p81) target = $region16
      $region15: #{tpu_custom_call.1} parent=5 // pred_region
        // Predicated region
        $region17: #{tpu_custom_call.1} parent=15 // pred_check
          %p84 = pneg %p33
        $region18: #{tpu_custom_call.1} parent=15 // pred_check_branch
          %86 = sbr.rel (%p84) target = $region20
        $region19: #{tpu_custom_call.1} parent=15 // pred_region
          %s87 = sand.u32 %s23, 1
          %s88 = scalar_lea.sflag [#allocation3], %s87
          %s89 = sand.u32 %s23, 1
          %s90 = smul.addr %s89, 8
          %s91 = scalar_lea.vmem [#allocation2], %s90
          %s93 = ssub.s32 128, 128
          %94 = vsyncadd %s88, %s93
          %s95 = smul.addr %s13, 128
          %s96 = scalar_lea.hbm %s0, %s95
          %s98 = sshll.u32 %s91, 4
          %s99 = int_to_ptr.vmem [resolvable:$true] %s98
          %101 = dma.hbm_to_vmem [thread:$0]  %s96, 128, %s99, %s88
        $region20: #{tpu_custom_call.1} parent=15 // pred_fallthru
          _
      $region16: #{tpu_custom_call.1} parent=5 // pred_fallthru
        _
      %p102 = scmp.le.s32.totalorder 1, %s13
      %p103 = scmp.lt.s32.totalorder %s13, 3
      %p104 = pnand %p102, %p103
      %p105 = pneg %p104
      // Predicated region
      $region21: #{tpu_custom_call.1} parent=5 // pred_check
        _
      $region22: #{tpu_custom_call.1} parent=5 // pred_check_branch
        %107 = sbr.rel (%p104) target = $region24
      $region23: #{tpu_custom_call.1} parent=5 // pred_region
        %s108 = ssub.s32 %s13, 1
        %s109 = sand.u32 %s26, 1
        %s110 = scalar_lea.sflag [#allocation3], %s109
        %s111 = sand.u32 %s26, 1
        %s112 = smul.addr %s111, 8
        %s113 = scalar_lea.vmem [#allocation2], %s112
        // Predicated region
        $region25: #{tpu_custom_call.1} parent=23 // pred_check
          %p114 = pneg %p39
        $region26: #{tpu_custom_call.1} parent=23 // pred_check_branch
          %116 = sbr.rel (%p114) target = $region28
        $region27: #{tpu_custom_call.1} parent=23 // pred_region
          %117 = dma.done %s110, 128
        $region28: #{tpu_custom_call.1} parent=23 // pred_fallthru
          _
        %s118 = sand.u32 %s26, 1
        %s119 = scalar_lea.sflag [#allocation3], %s118
        %s120 = sand.u32 %s26, 1
        %s121 = smul.addr %s120, 8
        %s122 = scalar_lea.vmem [#allocation2], %s121
        %p123 = pneg %p39
        %p124 = pneg %p36
        %p125 = pneg %p65
        %p126 = pneg %p62
        %s127 = sand.u32 %s52, 1
        %s128 = scalar_lea.sflag [#allocation4], %s127
        %s129 = sand.u32 %s52, 1
        %s130 = smul.addr %s129, 8
        %s131 = scalar_lea.vmem [#allocation5], %s130
        %v132 = vld [vmem:[%s113] sm:$0xff]
        %v133 = vand.u32 2147483647, %v132
        %vm134 = vcmp.le.f32.partialorder %v133, 1.0
        %v135 = vmul.f32 %v132, %v132
        %v136 = vsub.f32 2.0, %v133
        %v137 = vmul.f32 %v135, %v136
        %v138 = vsel %vm134, %v137, %v133
        %139 = vst [vmem:[%s131] sm:$0xff] %v138
        %s140 = sand.u32 %s52, 1
        %s141 = scalar_lea.sflag [#allocation4], %s140
        %s142 = sand.u32 %s52, 1
        %s143 = smul.addr %s142, 8
        %s144 = scalar_lea.vmem [#allocation5], %s143
        // Predicated region
        $region29: #{tpu_custom_call.1} parent=23 // pred_check
          %p145 = pneg %p62
        $region30: #{tpu_custom_call.1} parent=23 // pred_check_branch
          %147 = sbr.rel (%p145) target = $region32
        $region31: #{tpu_custom_call.1} parent=23 // pred_region
          %s149 = ssub.s32 128, 128
          %150 = vsyncadd %s141, %s149
          %s151 = smul.addr %s18, 128
          %s152 = scalar_lea.hbm %s1, %s151
          %s154 = sshll.u32 %s144, 4
          %s155 = int_to_ptr.vmem [resolvable:$true] %s154
          %157 = dma.vmem_to_hbm [thread:$0]  %s155, 128, %s152, %s141
        $region32: #{tpu_custom_call.1} parent=23 // pred_fallthru
          _
      $region24: #{tpu_custom_call.1} parent=5 // pred_fallthru
        _
      %p158 = scmp.le.s32.totalorder 2, %s13
      // Predicated region
      $region33: #{tpu_custom_call.1} parent=5 // pred_check
        %p159 = pneg %p158
      $region34: #{tpu_custom_call.1} parent=5 // pred_check_branch
        %161 = sbr.rel (%p159) target = $region36
      $region35: #{tpu_custom_call.1} parent=5 // pred_region
        %s162 = ssub.s32 %s13, 2
        // Predicated region
        $region37: #{tpu_custom_call.1} parent=35 // pred_check
          %p163 = pneg %p68
        $region38: #{tpu_custom_call.1} parent=35 // pred_check_branch
          %165 = sbr.rel (%p163) target = $region40
        $region39: #{tpu_custom_call.1} parent=35 // pred_region
          %s166 = sand.u32 %s53, 1
          %s167 = scalar_lea.sflag [#allocation4], %s166
          %s168 = sand.u32 %s53, 1
          %s169 = smul.addr %s168, 8
          %s170 = scalar_lea.vmem [#allocation5], %s169
          %171 = dma.done %s167, 128
        $region40: #{tpu_custom_call.1} parent=35 // pred_fallthru
          _
      $region36: #{tpu_custom_call.1} parent=5 // pred_fallthru
        _
    $region6: #{tpu_custom_call.1} parent=1 // loop_footer
      %s17 = sadd.s32 1, %s13
    $region7: #{tpu_custom_call.1} parent=1 // loop_footer_branch
      %12 = sbr.rel target = $region3
    $region8: #{tpu_custom_call.1} parent=1 // loop_exit
      _
    %172 = vsyncpa [#allocation3], 1
    %s173 = scalar_lea.sflag [#allocation3], 1
    %174 = vsyncpa %s173, 1
    %175 = vsyncpa [#allocation4], 1
    %s176 = scalar_lea.sflag [#allocation4], 1
    %177 = vsyncpa %s176, 1

</llo_original>
